<compile_context>
chip_gen: v6e
topology: v6e:2x2x1
jax: 0.10.0
libtpu: 0.0.40
codegen_flags: <defaults>
</compile_context>

<pallas_src>
import functools

import jax
import jax.numpy as jnp
from jax import lax
from jax.experimental import pallas as pl
from jax.experimental.pallas import tpu as pltpu


MASK_VALUE = float(jnp.finfo(jnp.float32).min)  # matches torch.finfo(fp32).min


# ----------------------------------------------------------------------------
# Kernel 1: tiled linear layer  y = x @ w (+ b), f32 accumulation
# ----------------------------------------------------------------------------
def _matmul_kernel(x_ref, w_ref, o_ref, acc_ref):
    @pl.when(pl.program_id(2) == 0)
    def _():
        acc_ref[...] = jnp.zeros_like(acc_ref)

    acc_ref[...] += jnp.dot(x_ref[...], w_ref[...],
                            preferred_element_type=jnp.float32)

    @pl.when(pl.program_id(2) == pl.num_programs(2) - 1)
    def _():
        o_ref[...] = acc_ref[...].astype(o_ref.dtype)


def _matmul_bias_kernel(x_ref, w_ref, b_ref, o_ref, acc_ref):
    @pl.when(pl.program_id(2) == 0)
    def _():
        acc_ref[...] = jnp.zeros_like(acc_ref)

    acc_ref[...] += jnp.dot(x_ref[...], w_ref[...],
                            preferred_element_type=jnp.float32)

    @pl.when(pl.program_id(2) == pl.num_programs(2) - 1)
    def _():
        o_ref[...] = (acc_ref[...] + b_ref[...].astype(jnp.float32)
                      ).astype(o_ref.dtype)


def linear_pallas(x, w, b=None, *, tm=256, tn=512, tk=512,
                  compute_dtype=jnp.bfloat16, out_dtype=jnp.float32):
    """y = x @ w (+ b).  x: (rows, K), w: (K, N), b: (N,) or None.

    Operands are cast to `compute_dtype` (bf16 by default -> native MXU rate and
    half the HBM/VMEM traffic); accumulation is always f32 in VMEM scratch.
    M, N and K are tiled so the weight never has to be fully VMEM-resident.
    """
    rows, K = x.shape
    Kw, N = w.shape
    assert K == Kw, (K, Kw)

    tm = rows if rows <= tm else tm                       # full, else 8-aligned
    tn = N if N <= tn else tn                             # full, else 128-aligned
    # Reduction dim: a partial K block would fold block padding into valid
    # outputs, so only tile K when it divides evenly; otherwise keep it whole.
    tk = K if (K <= tk or K % tk != 0) else tk

    grid = (pl.cdiv(rows, tm), pl.cdiv(N, tn), pl.cdiv(K, tk))

    in_specs = [
        pl.BlockSpec((tm, tk), lambda i, j, k: (i, k)),
        pl.BlockSpec((tk, tn), lambda i, j, k: (k, j)),
    ]
    operands = [x.astype(compute_dtype), w.astype(compute_dtype)]
    kernel = _matmul_kernel
    if b is not None:
        in_specs.append(pl.BlockSpec((1, tn), lambda i, j, k: (0, j)))
        operands.append(b.reshape(1, N).astype(jnp.float32))
        kernel = _matmul_bias_kernel

    return pl.pallas_call(
        kernel,
        out_shape=jax.ShapeDtypeStruct((rows, N), out_dtype),
        grid_spec=pltpu.PrefetchScalarGridSpec(
            num_scalar_prefetch=0,
            grid=grid,
            in_specs=in_specs,
            out_specs=pl.BlockSpec((tm, tn), lambda i, j, k: (i, j)),
            scratch_shapes=[pltpu.VMEM((tm, tn), jnp.float32)],
        ),
        compiler_params=pltpu.CompilerParams(
            dimension_semantics=("parallel", "parallel", "arbitrary"),
            vmem_limit_bytes=32 * 1024 * 1024),
    )(*operands)


# ----------------------------------------------------------------------------
# Kernel 2: local-causal attention core (flash-style online softmax)
# ----------------------------------------------------------------------------
def _attn_kernel(q_ref, k_ref, v_ref, o_ref, m_sc, l_sc, acc_sc, *,
                 window_size, tq, tk, n_k):
    qi = pl.program_id(1)
    ki = pl.program_id(2)

    @pl.when(ki == 0)
    def _():
        m_sc[...] = jnp.full_like(m_sc, MASK_VALUE)
        l_sc[...] = jnp.zeros_like(l_sc)
        acc_sc[...] = jnp.zeros_like(acc_sc)

    q_lo = qi * tq
    # Same arithmetic as the K/V index_map (minus its clamp): the absolute k
    # block this grid step is *supposed* to cover.  If the index_map had to
    # clamp (kb >= n_k) we skip, so clamped duplicate blocks never double-count.
    first_kb = jnp.maximum((q_lo - (window_size - 1)) // tk, 0)
    kb = first_kb + ki
    k_lo = kb * tk

    in_range = kb < n_k
    intersects = jnp.logical_and(k_lo <= q_lo + tq - 1,
                                 k_lo + tk - 1 > q_lo - window_size)
    should_run = jnp.logical_and(in_range, intersects)
    # Block fully inside the band -> no mask arithmetic at all (fast path).
    fully_inside = jnp.logical_and(k_lo + tk - 1 <= q_lo,
                                   k_lo > q_lo + tq - 1 - window_size)

    def process(masked):
        q = q_ref[0, 0]                                   # (G, tq, D)
        k = k_ref[0, 0]                                   # (G, tk, D)
        v = v_ref[0, 0]                                   # (G, tk, D)
        # NOTE: the reference module applies NO 1/sqrt(head_dim) scaling here.
        s = jnp.einsum("gqd,gkd->gqk", q, k,
                       preferred_element_type=jnp.float32)
        if masked:
            rows = q_lo + lax.broadcasted_iota(jnp.int32, (tq, tk), 0)
            cols = k_lo + lax.broadcasted_iota(jnp.int32, (tq, tk), 1)
            allowed = jnp.logical_and(cols <= rows, cols > rows - window_size)
            s = jnp.where(allowed[None], s, MASK_VALUE)
        m_prev = m_sc[...]
        m_next = jnp.maximum(m_prev, s.max(axis=-1, keepdims=True))
        alpha = jnp.exp(m_prev - m_next)
        p = jnp.exp(s - m_next)
        if masked:
            # Zero masked probabilities explicitly so rows with no allowed
            # column in this block contribute nothing, even while the running
            # max is still MASK_VALUE.
            p = jnp.where(allowed[None], p, 0.0)
        l_sc[...] = alpha * l_sc[...] + p.sum(axis=-1, keepdims=True)
        acc_sc[...] = alpha * acc_sc[...] + jnp.einsum(
            "gqk,gkd->gqd", p.astype(v.dtype), v,
            preferred_element_type=jnp.float32)
        m_sc[...] = m_next

    @pl.when(fully_inside)
    def _():
        process(masked=False)

    @pl.when(jnp.logical_and(should_run, jnp.logical_not(fully_inside)))
    def _():
        process(masked=True)

    @pl.when(ki == pl.num_programs(2) - 1)
    def _():
        # Padded query rows of a partial last q tile may have l == 0 here; the
        # resulting inf/nan lives only in the out-of-bounds slab, which Pallas
        # never writes back to HBM.
        o_ref[0] = (acc_sc[...] *
                    pl.reciprocal(l_sc[...], approx=True)).astype(o_ref.dtype)


def local_causal_attention(qkv, window_size, *, tq=None, tk=None):
    """qkv: (3, NG, G, S, D) with qkv[0]=Q, [1]=K, [2]=V.
    Returns (NG, G, S, D) in qkv.dtype (local-causal attention per head)."""
    three, NG, G, S, D = qkv.shape
    assert three == 3

    if tq is None:
        tq = S if S <= 256 else 256
    if tk is None:
        tk = S if S <= 128 else 128
        if S % tk != 0:
            tk = S   # avoid partial K/V blocks (block padding is unspecified)
    n_q = pl.cdiv(S, tq)
    n_k = pl.cdiv(S, tk)
    # Only k blocks that can intersect the causal/local band are visited.
    n_kb = min(n_k, pl.cdiv(tq + window_size - 1, tk) + 1)

    def q_index(n, qi, ki):
        return (0, n, 0, qi, 0)

    def kv_index_for(proj):
        def idx(n, qi, ki):
            first = jnp.maximum((qi * tq - (window_size - 1)) // tk, 0)
            kb = jnp.minimum(first + ki, n_k - 1)
            return (proj, n, 0, kb, 0)
        return idx

    kernel = functools.partial(_attn_kernel, window_size=window_size,
                               tq=tq, tk=tk, n_k=n_k)
    return pl.pallas_call(
        kernel,
        out_shape=jax.ShapeDtypeStruct((NG, G, S, D), qkv.dtype),
        grid_spec=pltpu.PrefetchScalarGridSpec(
            num_scalar_prefetch=0,
            grid=(NG, n_q, n_kb),
            in_specs=[
                pl.BlockSpec((1, 1, G, tq, D), q_index),
                pl.BlockSpec((1, 1, G, tk, D), kv_index_for(1)),
                pl.BlockSpec((1, 1, G, tk, D), kv_index_for(2)),
            ],
            out_specs=pl.BlockSpec((1, G, tq, D),
                                   lambda n, qi, ki: (n, 0, qi, 0)),
            scratch_shapes=[
                pltpu.VMEM((G, tq, 1), jnp.float32),   # running max m
                pltpu.VMEM((G, tq, 1), jnp.float32),   # running denom l
                pltpu.VMEM((G, tq, D), jnp.float32),   # running numerator
            ],
        ),
        compiler_params=pltpu.CompilerParams(
            dimension_semantics=("parallel", "parallel", "arbitrary")),
    )(qkv, qkv, qkv)   # same buffer, three views (Q / K / V index_maps)


# ----------------------------------------------------------------------------
# Module forward (eval mode, no cache, no extra masks)
# ----------------------------------------------------------------------------
def fuse_qkv_params(params):
    """Pre-fuse the bias-free Q/K/V projection weights once (hoisted concat)."""
    if "wqkv" not in params:
        params = dict(params)
        params["wqkv"] = jnp.concatenate(
            [params["wq"], params["wk"], params["wv"]], axis=1)
    return params


def inner_self_attention_forward(hidden_states, params, *, num_heads, head_dim,
                                 window_size, compute_dtype=jnp.bfloat16):
    """hidden_states: (B, S, E). params: wq/wk/wv/wo (E,E), bo (E,), optionally
    pre-fused wqkv (E,3E).  Weight convention: y = x @ w (transposed torch
    nn.Linear weights)."""
    B, S, E = hidden_states.shape
    H, D = num_heads, head_dim
    assert H * D == E

    wqkv = params.get("wqkv")
    if wqkv is None:
        wqkv = jnp.concatenate([params["wq"], params["wk"], params["wv"]], axis=1)

    x2 = hidden_states.reshape(B * S, E)
    # Fused QKV projection; output directly in compute_dtype to halve the HBM
    # traffic of the head-split shuffle and the attention input DMAs.
    qkv = linear_pallas(x2, wqkv, None, compute_dtype=compute_dtype,
                        out_dtype=compute_dtype)                   # (B*S, 3E)

    # Group heads so one attention grid step processes G heads (amortizes the
    # per-step overhead / DMA descriptors; G*D bounded to limit VMEM).
    G = 1
    for g in range(1, H + 1):
        if H % g == 0 and g * D <= 512:
            G = g
    NG = (B * H) // G

    # Single fused layout shuffle: (B*S, 3E) -> (3, B, H, S, D) -> head groups.
    qkv5 = qkv.reshape(B, S, 3, H, D).transpose(2, 0, 3, 1, 4)
    qkv5 = qkv5.reshape(3, NG, G, S, D)
    # TODO(synk): for head_dim % 128 == 0 the heads could be sliced straight out
    # of the (B*S, 3E) buffer via the attention in_specs, removing this shuffle.

    attn = local_causal_attention(qkv5, window_size)               # (NG,G,S,D)
    attn = attn.reshape(B, H, S, D).transpose(0, 2, 1, 3).reshape(B * S, E)

    out = linear_pallas(attn, params["wo"], params["bo"],
                        compute_dtype=compute_dtype, out_dtype=jnp.float32)
    out = out.reshape(B, S, E)
    outputs = {"present_key_value": None}                          # use_cache=False
    return out, outputs


# ----------------------------------------------------------------------------
# Pure-JAX reference (mirrors the torch non-flash path in eval mode, fp32)
# ----------------------------------------------------------------------------
def _reference_forward(hidden_states, params, *, num_heads, head_dim, window_size):
    B, S, E = hidden_states.shape
    q = hidden_states @ params["wq"]
    k = hidden_states @ params["wk"]
    v = hidden_states @ params["wv"]

    def split(t):
        return t.reshape(B, S, num_heads, head_dim).transpose(0, 2, 1, 3)

    q, k, v = split(q), split(k), split(v)
    s = jnp.einsum("bhqd,bhkd->bhqk",
                   q.astype(jnp.float32), k.astype(jnp.float32))
    i = jnp.arange(S)[:, None]
    j = jnp.arange(S)[None, :]
    allowed = (j <= i) & (j > i - window_size)
    s = jnp.where(allowed[None, None], s, MASK_VALUE)
    p = jax.nn.softmax(s, axis=-1)
    o = jnp.einsum("bhqk,bhkd->bhqd", p, v.astype(jnp.float32))
    o = o.transpose(0, 2, 1, 3).reshape(B, S, E)
    return o @ params["wo"] + params["bo"]


if __name__ == "__main__":
    key = jax.random.PRNGKey(0)
    k0, k1, k2, k3, k4, k5 = jax.random.split(key, 6)

    B, S, E = 2, 8, 32
    num_heads, head_dim = 4, 8
    window_size = 4

    params = {
        "wq": 0.05 * jax.random.normal(k0, (E, E), jnp.float32),
        "wk": 0.05 * jax.random.normal(k1, (E, E), jnp.float32),
        "wv": 0.05 * jax.random.normal(k2, (E, E), jnp.float32),
        "wo": 0.05 * jax.random.normal(k3, (E, E), jnp.float32),
        "bo": 0.05 * jax.random.normal(k4, (E,), jnp.float32),
    }
    params = fuse_qkv_params(params)
    hidden_states = jax.random.normal(k5, (B, S, E), jnp.float32)

    ref = _reference_forward(hidden_states, params, num_heads=num_heads,
                             head_dim=head_dim, window_size=window_size)

    # 1) f32 compute path (numerics match the torch module's fp32 _attn).
    out_f32, aux = inner_self_attention_forward(
        hidden_states, params, num_heads=num_heads, head_dim=head_dim,
        window_size=window_size, compute_dtype=jnp.float32)
    out_f32 = jax.block_until_ready(out_f32)
    assert out_f32.shape == (B, S, E), out_f32.shape
    assert out_f32.dtype == jnp.float32
    assert aux["present_key_value"] is None
    assert jnp.allclose(out_f32, ref, atol=5e-3, rtol=5e-3), "f32 path mismatch"

    # 2) bf16-operand / f32-accumulation fast path (default).
    out_bf16, _ = inner_self_attention_forward(
        hidden_states, params, num_heads=num_heads, head_dim=head_dim,
        window_size=window_size, compute_dtype=jnp.bfloat16)
    out_bf16 = jax.block_until_ready(out_bf16)
    assert out_bf16.shape == (B, S, E) and out_bf16.dtype == jnp.float32
    assert jnp.allclose(out_bf16, ref, atol=3e-2, rtol=3e-2), "bf16 path mismatch"

    print("KERNEL_OK")
</pallas_src>

<mosaic_0001>
module attributes {stable_mosaic.version = 11 : i64} {
  func.func @_matmul_kernel(%arg0: i32, %arg1: i32, %arg2: i32, %arg3: memref<16x32xf32, #tpu.memory_space<vmem>>, %arg4: memref<32x96xf32, #tpu.memory_space<vmem>>, %arg5: memref<16x96xf32, #tpu.memory_space<vmem>>, %arg6: memref<16x96xf32, #tpu.memory_space<vmem>>) attributes {dimension_semantics = [#tpu.dimension_semantics<parallel>, #tpu.dimension_semantics<parallel>, #tpu.dimension_semantics<arbitrary>], iteration_bounds = array<i64: 1, 1, 1>, scalar_prefetch = 0 : i64, scratch_operands = 1 : i64, tpu.core_type = #tpu.core_type<tc>, window_params = [{transform_indices = @transform_0, window_bounds = array<i64: 16, 32>}, {transform_indices = @transform_1, window_bounds = array<i64: 32, 96>}, {transform_indices = @transform_2, window_bounds = array<i64: 16, 96>}]} {
    %c0_i32 = arith.constant 0 : i32
    %0 = arith.cmpi eq, %arg2, %c0_i32 : i32
    %1 = arith.extui %0 : i1 to i32
    %c0_i32_0 = arith.constant 0 : i32
    %2 = arith.cmpi ne, %1, %c0_i32_0 : i32
    scf.if %2 {
      %cst_10 = arith.constant 0.000000e+00 : f32
      %12 = vector.broadcast %cst_10 : f32 to vector<16x96xf32>
      %c0_11 = arith.constant 0 : index
      %c0_12 = arith.constant 0 : index
      %13 = vector.load %arg6[%c0_11, %c0_12] : memref<16x96xf32, #tpu.memory_space<vmem>>, vector<16x96xf32>
      tpu.vector_store %arg6[%c0_11, %c0_12], %12 {strides = array<i32>} : memref<16x96xf32, #tpu.memory_space<vmem>>, vector<16x96xf32>,
    } else {
    }
    %c0 = arith.constant 0 : index
    %c0_1 = arith.constant 0 : index
    %3 = vector.load %arg6[%c0, %c0_1] : memref<16x96xf32, #tpu.memory_space<vmem>>, vector<16x96xf32>
    %c0_2 = arith.constant 0 : index
    %c0_3 = arith.constant 0 : index
    %4 = vector.load %arg3[%c0_2, %c0_3] : memref<16x32xf32, #tpu.memory_space<vmem>>, vector<16x32xf32>
    %c0_4 = arith.constant 0 : index
    %c0_5 = arith.constant 0 : index
    %5 = vector.load %arg4[%c0_4, %c0_5] : memref<32x96xf32, #tpu.memory_space<vmem>>, vector<32x96xf32>
    %cst = arith.constant dense<0.000000e+00> : vector<16x96xf32>
    %6 = tpu.matmul %4, %5, %cst {dimension_numbers = #tpu.dot_dimension_numbers<[1], [0], [0], [1], [0, 0, 1, 1], [], []>} : vector<16x32xf32>, vector<32x96xf32>, vector<16x96xf32> -> vector<16x96xf32>
    %7 = arith.addf %3, %6 : vector<16x96xf32>
    %c0_6 = arith.constant 0 : index
    %c0_7 = arith.constant 0 : index
    %8 = vector.load %arg6[%c0_6, %c0_7] : memref<16x96xf32, #tpu.memory_space<vmem>>, vector<16x96xf32>
    tpu.vector_store %arg6[%c0_6, %c0_7], %7 {strides = array<i32>} : memref<16x96xf32, #tpu.memory_space<vmem>>, vector<16x96xf32>,
    %c0_i32_8 = arith.constant 0 : i32
    %9 = arith.cmpi eq, %arg2, %c0_i32_8 : i32
    %10 = arith.extui %9 : i1 to i32
    %c0_i32_9 = arith.constant 0 : i32
    %11 = arith.cmpi ne, %10, %c0_i32_9 : i32
    scf.if %11 {
      %c0_10 = arith.constant 0 : index
      %c0_11 = arith.constant 0 : index
      %12 = vector.load %arg6[%c0_10, %c0_11] : memref<16x96xf32, #tpu.memory_space<vmem>>, vector<16x96xf32>
      %c0_12 = arith.constant 0 : index
      %c0_13 = arith.constant 0 : index
      %13 = vector.load %arg5[%c0_12, %c0_13] : memref<16x96xf32, #tpu.memory_space<vmem>>, vector<16x96xf32>
      tpu.vector_store %arg5[%c0_12, %c0_13], %12 {strides = array<i32>} : memref<16x96xf32, #tpu.memory_space<vmem>>, vector<16x96xf32>,
    } else {
    }
    return
  }
  func.func @transform_0(%arg0: i32, %arg1: i32, %arg2: i32) -> (i32, i32) {
    %c0_i32 = arith.constant 0 : i32
    return %arg0, %arg2 : i32, i32
  }
  func.func @transform_1(%arg0: i32, %arg1: i32, %arg2: i32) -> (i32, i32) {
    %c0_i32 = arith.constant 0 : i32
    return %arg2, %arg1 : i32, i32
  }
  func.func @transform_2(%arg0: i32, %arg1: i32, %arg2: i32) -> (i32, i32) {
    %c0_i32 = arith.constant 0 : i32
    return %arg0, %arg1 : i32, i32
  }
}

</mosaic_0001>

<llo_original>
// kernel: tpu_custom_call.1
$region0: #{tpu_custom_call.1}
  #allocation0 [shape = 'u32[]', space=smem, size = 0x4, offset = 0x4, fixed_abs, tag = 'smem constant byte address 0x4 - core index']
  #allocation1 [shape = 'u32[144,128]{1,0:T(1,128)}', space=vmem, size = 0x12000, scoped, tag = 'internal scratch']
  #allocation2 [shape = 'f32[16,96]{1,0:T(8,128)}', space=vmem, size = 0x2000, scoped, tag = 'scratch operand']
  %s0 = inlined_call_operand.hbm [shape: f32[16,32], index: 0, kind: input, shape index: {}]
  %s1 = inlined_call_operand.hbm [shape: f32[32,96], index: 1, kind: input, shape index: {}]
  %s2 = inlined_call_operand.hbm [shape: f32[16,96], index: 2, kind: output, shape index: {}]
  %s3 = sld [smem:[#allocation0]]
  $region34: #{tpu_custom_call.1} parent=0
    _
  %s5 = ssub.s32 1, %s3
  %s6 = scalar_select 0, %s5, %s3
  $region1: #{tpu_custom_call.1} parent=0
    #allocation3 [shape = 'u8[8192]{0}', space=vmem, size = 0x2000, scoped, tag = 'input window, operand 0, single buffered']
    #allocation4 [shape = 's32[1]{0}', space=sflag, size = 0x4, scoped, tag = 'scoped memory for tpu_custom_call.1']
    #allocation5 [shape = 's32[1]{0}', space=sflag, size = 0x4, scoped, tag = 'scoped memory for tpu_custom_call.1']
    #allocation6 [shape = 'u8[16384]{0}', space=vmem, size = 0x4000, scoped, tag = 'input window, operand 1, single buffered']
    #allocation7 [shape = 's32[1]{0}', space=sflag, size = 0x4, scoped, tag = 'scoped memory for tpu_custom_call.1']
    #allocation8 [shape = 'u8[8192]{0}', space=vmem, size = 0x2000, scoped, tag = 'output window, operand 0, single buffered']
    %7 = vsyncpa [#allocation4], 0
    %8 = vsyncpa [#allocation7], 0
    %9 = vsyncpa [#allocation5], 0
    // Predicated region
    $region2: #{tpu_custom_call.1} parent=1 // pred_check
      _
    $region3: #{tpu_custom_call.1} parent=1 // pred_check_branch
      %11 = sbr.rel (0) target = $region5
    $region4: #{tpu_custom_call.1} parent=1 // pred_region
      %s13 = ssub.s32 256, 256
      %14 = vsyncadd [#allocation4], %s13
      %s15 = sshll.u32 [#allocation3], 4
      %s16 = int_to_ptr.vmem [resolvable:$true] %s15
      %21 = dma.hbm_to_vmem [thread:$0]  %s0, 256, %s16, [#allocation4], 128, 128, 8
    $region5: #{tpu_custom_call.1} parent=1 // pred_fallthru
      _
    // Predicated region
    $region6: #{tpu_custom_call.1} parent=1 // pred_check
      _
    $region7: #{tpu_custom_call.1} parent=1 // pred_check_branch
      %23 = sbr.rel (0) target = $region9
    $region8: #{tpu_custom_call.1} parent=1 // pred_region
      %s25 = ssub.s32 512, 512
      %26 = vsyncadd [#allocation7], %s25
      %s27 = sshll.u32 [#allocation6], 4
      %s28 = int_to_ptr.vmem [resolvable:$true] %s27
      %33 = dma.hbm_to_vmem [thread:$0]  %s1, 512, %s28, [#allocation7], 128, 128, 8
    $region9: #{tpu_custom_call.1} parent=1 // pred_fallthru
      _
    // Predicated region
    $region10: #{tpu_custom_call.1} parent=1 // pred_check
      _
    $region11: #{tpu_custom_call.1} parent=1 // pred_check_branch
      %35 = sbr.rel (0) target = $region13
    $region12: #{tpu_custom_call.1} parent=1 // pred_region
      %36 = dma.done [#allocation4], 256
    $region13: #{tpu_custom_call.1} parent=1 // pred_fallthru
      _
    // Predicated region
    $region14: #{tpu_custom_call.1} parent=1 // pred_check
      _
    $region15: #{tpu_custom_call.1} parent=1 // pred_check_branch
      %38 = sbr.rel (0) target = $region17
    $region16: #{tpu_custom_call.1} parent=1 // pred_region
      %39 = dma.done [#allocation7], 512
    $region17: #{tpu_custom_call.1} parent=1 // pred_fallthru
      _
    %p40 = scmp.eq.s32.totalorder 0, 0
    // Predicated region
    $region18: #{tpu_custom_call.1} parent=1 // pred_check
      %p41 = pneg %p40
    $region19: #{tpu_custom_call.1} parent=1 // pred_check_branch
      %43 = sbr.rel (%p41) target = $region21
    $region20: #{tpu_custom_call.1} parent=1 // pred_region
      %vm44 = vcmask 785408
      %45 = vst.msk [vmem:[#allocation2] sm:$0xff] %vm44, 0.0
      %46 = vst.msk [vmem:[#allocation2 + $0x8] sm:$0xff] %vm44, 0.0
    $region21: #{tpu_custom_call.1} parent=1 // pred_fallthru
      _
    %v47 = vld [vmem:[#allocation2] sm:$0xff]
    %v48 = vld [vmem:[#allocation2 + $0x8] sm:$0xff]
    %v49 = vld [vmem:[#allocation3] sm:$0xff]
    %v50 = vld [vmem:[#allocation3 + $0x8] sm:$0xff]
    %v51 = vld [vmem:[#allocation6] sm:$0xff]
    %v52 = vld [vmem:[#allocation6 + $0x8] sm:$0xff]
    %v53 = vld [vmem:[#allocation6 + $0x10] sm:$0xff]
    %v54 = vld [vmem:[#allocation6 + $0x18] sm:$0xff]
    %vm55 = vcmask 261120
    %v57 = vsel %vm55, %v49, 0
    %v60 = vsel %vm55, %v50, 0
    %62 = vmatprep.subr.mxu0 0.0
    %63 = vmatpush1.msra.mxu0 0.0
    %64 = vmatprep.subr.mxu0 0.0
    %65 = vmatpush1.msra.mxu0 0.0
    %66 = vmatprep.subr.mxu0 0.0
    %67 = vmatpush1.msra.mxu0 0.0
    %68 = vmatprep.subr.mxu0 0.0
    %69 = vmatpush1.msra.mxu0 0.0
    %70 = vmatprep.subr.mxu0 0.0
    %71 = vmatpush1.msra.mxu0 0.0
    %72 = vmatprep.subr.mxu0 0.0
    %73 = vmatpush1.msra.mxu0 0.0
    %74 = vmatprep.subr.mxu0 0.0
    %75 = vmatpush1.msra.mxu0 0.0
    %76 = vmatprep.subr.mxu0 0.0
    %77 = vmatpush1.msra.mxu0 0.0
    %78 = vmatprep.subr.mxu0 0.0
    %79 = vmatpush1.msra.mxu0 0.0
    %80 = vmatprep.subr.mxu0 0.0
    %81 = vmatpush1.msra.mxu0 0.0
    %82 = vmatprep.subr.mxu0 0.0
    %83 = vmatpush1.msra.mxu0 0.0
    %84 = vmatprep.subr.mxu0 0.0
    %85 = vmatpush1.msra.mxu0 0.0
    %86 = vmatprep.subr.mxu0 0.0
    %87 = vmatpush1.msra.mxu0 %v54
    %88 = vmatprep.subr.mxu0 0.0
    %89 = vmatpush1.msra.mxu0 %v53
    %90 = vmatprep.subr.mxu0 0.0
    %91 = vmatpush1.msra.mxu0 %v52
    %92 = vmatprep.subr.mxu0 0.0
    %93 = vmatpush1.msra.mxu0 %v51
    %94 = vmatprep.subr.mxu0 0.0
    %95 = vmatpush2.msra.mxu0 0.0
    %96 = vmatprep.subr.mxu0 0.0
    %97 = vmatpush2.msra.mxu0 0.0
    %98 = vmatprep.subr.mxu0 0.0
    %99 = vmatpush2.msra.mxu0 0.0
    %100 = vmatprep.subr.mxu0 0.0
    %101 = vmatpush2.msra.mxu0 0.0
    %102 = vmatprep.subr.mxu0 0.0
    %103 = vmatpush2.msra.mxu0 0.0
    %104 = vmatprep.subr.mxu0 0.0
    %105 = vmatpush2.msra.mxu0 0.0
    %106 = vmatprep.subr.mxu0 0.0
    %107 = vmatpush2.msra.mxu0 0.0
    %108 = vmatprep.subr.mxu0 0.0
    %109 = vmatpush2.msra.mxu0 0.0
    %110 = vmatprep.subr.mxu0 0.0
    %111 = vmatpush2.msra.mxu0 0.0
    %112 = vmatprep.subr.mxu0 0.0
    %113 = vmatpush2.msra.mxu0 0.0
    %114 = vmatprep.subr.mxu0 0.0
    %115 = vmatpush2.msra.mxu0 0.0
    %116 = vmatprep.subr.mxu0 0.0
    %117 = vmatpush2.msra.mxu0 0.0
    %118 = vmatprep.subr.mxu0 0.0
    %119 = vmatpush2.msra.mxu0 0.0
    %120 = vmatprep.subr.mxu0 0.0
    %121 = vmatpush2.msra.mxu0 0.0
    %122 = vmatprep.subr.mxu0 0.0
    %123 = vmatpush2.msra.mxu0 0.0
    %124 = vmatprep.subr.mxu0 0.0
    %125 = vmatpush2.msra.mxu0 0.0
    %126 = vmatprep.mubr.f32.mxu0 0.0
    %127 = vmatmul.mubr.f32.gmra.mxu0 %v57
    %v128 = vpop.f32.mrf.mxu0
    %v129 = vadd.f32 0.0, %v128
    %v130 = vpop.f32.mrf.mxu0
    %131 = vmatprep.mubr.f32.mxu0 0.0
    %132 = vmatmul.mubr.f32.gmra.mxu0 %v60
    %v133 = vpop.f32.mrf.mxu0
    %v134 = vadd.f32 0.0, %v133
    %v135 = vpop.f32.mrf.mxu0
    %136 = vdwg.mxu0
    %v137 = vadd.f32 %v47, %v129
    %v138 = vadd.f32 %v48, %v134
    %vm139 = vcmask 785408
    %140 = vst.msk [vmem:[#allocation2] sm:$0xff] %vm139, %v137
    %141 = vst.msk [vmem:[#allocation2 + $0x8] sm:$0xff] %vm139, %v138
    // Predicated region
    $region22: #{tpu_custom_call.1} parent=1 // pred_check
      %p142 = pneg %p40
    $region23: #{tpu_custom_call.1} parent=1 // pred_check_branch
      %144 = sbr.rel (%p142) target = $region25
    $region24: #{tpu_custom_call.1} parent=1 // pred_region
      %v145 = vld [vmem:[#allocation2] sm:$0xff]
      %v146 = vld [vmem:[#allocation2 + $0x8] sm:$0xff]
      %147 = vst.msk [vmem:[#allocation8] sm:$0xff] %vm139, %v145
      %148 = vst.msk [vmem:[#allocation8 + $0x8] sm:$0xff] %vm139, %v146
    $region25: #{tpu_custom_call.1} parent=1 // pred_fallthru
      _
    // Predicated region
    $region26: #{tpu_custom_call.1} parent=1 // pred_check
      _
    $region27: #{tpu_custom_call.1} parent=1 // pred_check_branch
      %150 = sbr.rel (0) target = $region29
    $region28: #{tpu_custom_call.1} parent=1 // pred_region
      %s152 = ssub.s32 256, 256
      %153 = vsyncadd [#allocation5], %s152
      %s154 = sshll.u32 [#allocation8], 4
      %s155 = int_to_ptr.vmem [resolvable:$true] %s154
      %160 = dma.vmem_to_hbm [thread:$0]  %s155, 256, %s2, [#allocation5], 128, 128, 8
    $region29: #{tpu_custom_call.1} parent=1 // pred_fallthru
      _
    // Predicated region
    $region30: #{tpu_custom_call.1} parent=1 // pred_check
      _
    $region31: #{tpu_custom_call.1} parent=1 // pred_check_branch
      %162 = sbr.rel (0) target = $region33
    $region32: #{tpu_custom_call.1} parent=1 // pred_region
      %163 = dma.done [#allocation5], 256
    $region33: #{tpu_custom_call.1} parent=1 // pred_fallthru
      _
    %164 = vsyncpa [#allocation4], 1
    %165 = vsyncpa [#allocation7], 1
    %166 = vsyncpa [#allocation5], 1

</llo_original>
